<compile_context>
chip_gen: v7x
topology: tpu7x:2x2x1
jax: 0.10.0
libtpu: 0.0.40
codegen_flags: <defaults>
</compile_context>

<pallas_src>
import jax
import jax.numpy as jnp
from jax.experimental import pallas as pl
from jax.experimental.pallas import tpu as pltpu

# --- model hyper-parameters (from the PyTorch module) ------------------------
embedding_dim = 20
hidden_dim1 = 20
hidden_dim2 = 10
num_movies = 9742
num_users = 610
output_dim = 1

_LANE = 128       # TPU lane width
_MAX_TB = 8192    # batch-lanes per grid step (perf guidance: 2048-8192)


def _round_up(x, m):
    return ((x + m - 1) // m) * m


def _cdiv(a, b):
    return (a + b - 1) // b


# --- Pallas kernel: fused fc1+relu+fc2+relu+fc3+sigmoid (batch on lanes) -----
def mlp_kernel(u_ref, m_ref, w1u_ref, w1m_ref, b1_ref, w2_ref, b2_ref,
               w3_ref, b3_ref, o_ref):
    # All activations are [feature, batch_tile]; batch rides the lane axis.
    # Embedding tiles arrive in bf16; all math after the load is f32.
    u = u_ref[...].astype(jnp.float32)
    m = m_ref[...].astype(jnp.float32)
    h1 = (jnp.dot(w1u_ref[...], u, preferred_element_type=jnp.float32)
          + jnp.dot(w1m_ref[...], m, preferred_element_type=jnp.float32)
          + b1_ref[...])
    h1 = jnp.maximum(h1, 0.0)                                        # ReLU
    h2 = jnp.dot(w2_ref[...], h1, preferred_element_type=jnp.float32) + b2_ref[...]
    h2 = jnp.maximum(h2, 0.0)                                        # ReLU
    h3 = jnp.dot(w3_ref[...], h2, preferred_element_type=jnp.float32) + b3_ref[...]
    # sigmoid: exp on the EUP; exact reciprocal (approx=False) per review.
    o_ref[...] = pl.reciprocal(1.0 + jnp.exp(-h3), approx=False)


def mlp_forward(u_t, m_t, w1u, w1m, b1, w2, b2, w3, b3):
    """u_t, m_t: (embedding_dim, B) bf16 embedding slabs (batch on lanes)."""
    e, b = u_t.shape

    # Pick the batch tile: as large as possible (up to _MAX_TB lanes) ...
    tb = min(_MAX_TB, _round_up(b, _LANE))
    # ... but guarantee >=2 grid steps when the batch is splittable, so the
    # "parallel" axis can feed both v7x TensorCores (harmless on v5e/v6e).
    if b > _LANE and _cdiv(b, tb) < 2:
        tb = _round_up(_cdiv(b, 2), _LANE)

    grid = (_cdiv(b, tb),)            # ragged last block masked by Pallas; no jnp.pad
    const = lambda i: (0, 0)          # weights/biases VMEM-resident across the grid

    out = pl.pallas_call(
        mlp_kernel,
        out_shape=jax.ShapeDtypeStruct((output_dim, b), jnp.float32),
        grid=grid,
        in_specs=[
            pl.BlockSpec((e, tb), lambda i: (0, i)),   # user-emb tile (pipelined)
            pl.BlockSpec((e, tb), lambda i: (0, i)),   # movie-emb tile (pipelined)
            pl.BlockSpec(w1u.shape, const),
            pl.BlockSpec(w1m.shape, const),
            pl.BlockSpec(b1.shape, const),
            pl.BlockSpec(w2.shape, const),
            pl.BlockSpec(b2.shape, const),
            pl.BlockSpec(w3.shape, const),
            pl.BlockSpec(b3.shape, const),
        ],
        out_specs=pl.BlockSpec((output_dim, tb), lambda i: (0, i)),  # lane-dense
        compiler_params=pltpu.CompilerParams(
            dimension_semantics=("parallel",)),   # v7x: shard tiles over 2 TCs
    )(u_t, m_t, w1u, w1m, b1, w2, b2, w3, b3)
    return out                                     # (1, B)


# --- full module forward ------------------------------------------------------
def movie_recommendation_mlp(params, user_idx, movie_idx):
    # Tables are stored pre-transposed (E, N), so the gather already emits
    # (E, B) with batch on the lane axis: no wrapper transpose round-trip.
    u_t = jnp.take(params["user_emb_t"], user_idx, axis=1)    # (E, B) bf16
    m_t = jnp.take(params["movie_emb_t"], movie_idx, axis=1)  # (E, B) bf16
    out = mlp_forward(u_t, m_t,
                      params["w1_user"], params["w1_movie"], params["b1"],
                      params["w2"], params["b2"],
                      params["w3"], params["b3"])              # (1, B)
    return out[0][:, None]                                     # (B, 1)


# --- deterministic parameter init (PyTorch-layout compatible) -----------------
def init_params(key):
    ks = jax.random.split(key, 8)
    # nn.Embedding default init: N(0, 1).  Stored pre-transposed (E, N) so the
    # gather emits (E, B), and in bf16 to halve the dominant HBM traffic.
    user_emb_t = jax.random.normal(
        ks[0], (embedding_dim, num_users), jnp.float32).astype(jnp.bfloat16)
    movie_emb_t = jax.random.normal(
        ks[1], (embedding_dim, num_movies), jnp.float32).astype(jnp.bfloat16)

    def linear(kw, kb, fan_in, fan_out):
        # nn.Linear default: U(-1/sqrt(fan_in), 1/sqrt(fan_in)); weight (out, in)
        bound = 1.0 / float(fan_in) ** 0.5
        w = jax.random.uniform(kw, (fan_out, fan_in), jnp.float32, -bound, bound)
        b = jax.random.uniform(kb, (fan_out, 1), jnp.float32, -bound, bound)
        return w, b

    w1, b1 = linear(ks[2], ks[3], 2 * embedding_dim, hidden_dim1)
    w2, b2 = linear(ks[4], ks[5], hidden_dim1, hidden_dim2)
    w3, b3 = linear(ks[6], ks[7], hidden_dim2, output_dim)

    return dict(user_emb_t=user_emb_t, movie_emb_t=movie_emb_t,
                w1_user=w1[:, :embedding_dim],     # (H1, E)
                w1_movie=w1[:, embedding_dim:],    # (H1, E)
                b1=b1, w2=w2, b2=b2, w3=w3, b3=b3)


# --- pure-JAX reference (exact PyTorch forward semantics, same params) --------
def reference_forward(params, user_idx, movie_idx):
    u = jnp.take(params["user_emb_t"], user_idx, axis=1).T.astype(jnp.float32)
    m = jnp.take(params["movie_emb_t"], movie_idx, axis=1).T.astype(jnp.float32)
    x = jnp.concatenate([u, m], axis=-1)                       # (B, 2E)
    w1 = jnp.concatenate([params["w1_user"], params["w1_movie"]], axis=1)
    h1 = jnp.maximum(x @ w1.T + params["b1"][:, 0], 0.0)
    h2 = jnp.maximum(h1 @ params["w2"].T + params["b2"][:, 0], 0.0)
    h3 = h2 @ params["w3"].T + params["b3"][:, 0]              # (B, 1)
    return jax.nn.sigmoid(h3)


if __name__ == "__main__":
    root = jax.random.PRNGKey(0)
    kp, ki = jax.random.split(root)
    params = init_params(kp)

    def check(batch, key):
        k1, k2 = jax.random.split(key)
        user_idx = jax.random.randint(k1, (batch,), 0, num_users, dtype=jnp.int32)
        movie_idx = jax.random.randint(k2, (batch,), 0, num_movies, dtype=jnp.int32)

        out = movie_recommendation_mlp(params, user_idx, movie_idx)
        out = jax.block_until_ready(out)

        assert out.shape == (batch, output_dim)
        assert bool(jnp.all(jnp.isfinite(out)))
        assert bool(jnp.all((out >= 0.0) & (out <= 1.0)))
        ref = reference_forward(params, user_idx, movie_idx)
        assert bool(jnp.allclose(out, ref, rtol=2e-3, atol=2e-3)), (
            f"batch={batch}: max abs err {float(jnp.max(jnp.abs(out - ref)))}")

    check(8, jax.random.fold_in(ki, 0))     # single (ragged) tile
    check(300, jax.random.fold_in(ki, 1))   # multi-tile grid + ragged last block
    print("KERNEL_OK")
</pallas_src>

<mosaic_0001>
module attributes {stable_mosaic.version = 11 : i64} {
  func.func @mlp_kernel(%arg0: i32, %arg1: memref<20x128xbf16, #tpu.memory_space<vmem>>, %arg2: memref<20x128xbf16, #tpu.memory_space<vmem>>, %arg3: memref<20x20xf32, #tpu.memory_space<vmem>>, %arg4: memref<20x20xf32, #tpu.memory_space<vmem>>, %arg5: memref<20x1xf32, #tpu.memory_space<vmem>>, %arg6: memref<10x20xf32, #tpu.memory_space<vmem>>, %arg7: memref<10x1xf32, #tpu.memory_space<vmem>>, %arg8: memref<1x10xf32, #tpu.memory_space<vmem>>, %arg9: memref<1x1xf32, #tpu.memory_space<vmem>>, %arg10: memref<1x128xf32, #tpu.memory_space<vmem>>) attributes {dimension_semantics = [#tpu.dimension_semantics<parallel>], iteration_bounds = array<i64: 1>, scalar_prefetch = 0 : i64, scratch_operands = 0 : i64, tpu.core_type = #tpu.core_type<tc>, window_params = [{transform_indices = @transform_0, window_bounds = array<i64: 20, 128>}, {transform_indices = @transform_1, window_bounds = array<i64: 20, 128>}, {pipeline_mode = #tpu.pipeline_mode<synchronous>, transform_indices = @transform_2, window_bounds = array<i64: 20, 20>}, {pipeline_mode = #tpu.pipeline_mode<synchronous>, transform_indices = @transform_3, window_bounds = array<i64: 20, 20>}, {pipeline_mode = #tpu.pipeline_mode<synchronous>, transform_indices = @transform_4, window_bounds = array<i64: 20, 1>}, {pipeline_mode = #tpu.pipeline_mode<synchronous>, transform_indices = @transform_5, window_bounds = array<i64: 10, 20>}, {pipeline_mode = #tpu.pipeline_mode<synchronous>, transform_indices = @transform_6, window_bounds = array<i64: 10, 1>}, {pipeline_mode = #tpu.pipeline_mode<synchronous>, transform_indices = @transform_7, window_bounds = array<i64: 1, 10>}, {pipeline_mode = #tpu.pipeline_mode<synchronous>, transform_indices = @transform_8, window_bounds = array<i64: 1, 1>}, {transform_indices = @transform_9, window_bounds = array<i64: 1, 128>}]} {
    %c0 = arith.constant 0 : index
    %c0_0 = arith.constant 0 : index
    %0 = vector.load %arg1[%c0, %c0_0] : memref<20x128xbf16, #tpu.memory_space<vmem>>, vector<20x128xbf16>
    %1 = arith.extf %0 : vector<20x128xbf16> to vector<20x128xf32>
    %c0_1 = arith.constant 0 : index
    %c0_2 = arith.constant 0 : index
    %2 = vector.load %arg2[%c0_1, %c0_2] : memref<20x128xbf16, #tpu.memory_space<vmem>>, vector<20x128xbf16>
    %3 = arith.extf %2 : vector<20x128xbf16> to vector<20x128xf32>
    %c0_3 = arith.constant 0 : index
    %c0_4 = arith.constant 0 : index
    %4 = vector.load %arg3[%c0_3, %c0_4] : memref<20x20xf32, #tpu.memory_space<vmem>>, vector<20x20xf32>
    %cst = arith.constant dense<0.000000e+00> : vector<20x128xf32>
    %5 = tpu.matmul %4, %1, %cst {dimension_numbers = #tpu.dot_dimension_numbers<[1], [0], [0], [1], [0, 0, 1, 1], [], []>} : vector<20x20xf32>, vector<20x128xf32>, vector<20x128xf32> -> vector<20x128xf32>
    %c0_5 = arith.constant 0 : index
    %c0_6 = arith.constant 0 : index
    %6 = vector.load %arg4[%c0_5, %c0_6] : memref<20x20xf32, #tpu.memory_space<vmem>>, vector<20x20xf32>
    %cst_7 = arith.constant dense<0.000000e+00> : vector<20x128xf32>
    %7 = tpu.matmul %6, %3, %cst_7 {dimension_numbers = #tpu.dot_dimension_numbers<[1], [0], [0], [1], [0, 0, 1, 1], [], []>} : vector<20x20xf32>, vector<20x128xf32>, vector<20x128xf32> -> vector<20x128xf32>
    %8 = arith.addf %5, %7 : vector<20x128xf32>
    %c0_8 = arith.constant 0 : index
    %c0_9 = arith.constant 0 : index
    %9 = vector.load %arg5[%c0_8, %c0_9] : memref<20x1xf32, #tpu.memory_space<vmem>>, vector<20x1xf32>
    %10 = vector.broadcast %9 : vector<20x1xf32> to vector<20x128xf32>
    %11 = arith.addf %8, %10 : vector<20x128xf32>
    %cst_10 = arith.constant 0.000000e+00 : f32
    %12 = vector.broadcast %cst_10 : f32 to vector<20x128xf32>
    %13 = arith.maximumf %11, %12 : vector<20x128xf32>
    %c0_11 = arith.constant 0 : index
    %c0_12 = arith.constant 0 : index
    %14 = vector.load %arg6[%c0_11, %c0_12] : memref<10x20xf32, #tpu.memory_space<vmem>>, vector<10x20xf32>
    %cst_13 = arith.constant dense<0.000000e+00> : vector<10x128xf32>
    %15 = tpu.matmul %14, %13, %cst_13 {dimension_numbers = #tpu.dot_dimension_numbers<[1], [0], [0], [1], [0, 0, 1, 1], [], []>} : vector<10x20xf32>, vector<20x128xf32>, vector<10x128xf32> -> vector<10x128xf32>
    %c0_14 = arith.constant 0 : index
    %c0_15 = arith.constant 0 : index
    %16 = vector.load %arg7[%c0_14, %c0_15] : memref<10x1xf32, #tpu.memory_space<vmem>>, vector<10x1xf32>
    %17 = vector.broadcast %16 : vector<10x1xf32> to vector<10x128xf32>
    %18 = arith.addf %15, %17 : vector<10x128xf32>
    %cst_16 = arith.constant 0.000000e+00 : f32
    %19 = vector.broadcast %cst_16 : f32 to vector<10x128xf32>
    %20 = arith.maximumf %18, %19 : vector<10x128xf32>
    %c0_17 = arith.constant 0 : index
    %c0_18 = arith.constant 0 : index
    %21 = vector.load %arg8[%c0_17, %c0_18] : memref<1x10xf32, #tpu.memory_space<vmem>>, vector<1x10xf32>
    %cst_19 = arith.constant dense<0.000000e+00> : vector<1x128xf32>
    %22 = tpu.matmul %21, %20, %cst_19 {dimension_numbers = #tpu.dot_dimension_numbers<[1], [0], [0], [1], [0, 0, 1, 1], [], []>} : vector<1x10xf32>, vector<10x128xf32>, vector<1x128xf32> -> vector<1x128xf32>
    %c0_20 = arith.constant 0 : index
    %c0_21 = arith.constant 0 : index
    %23 = vector.load %arg9[%c0_20, %c0_21] : memref<1x1xf32, #tpu.memory_space<vmem>>, vector<1x1xf32>
    %24 = vector.broadcast %23 : vector<1x1xf32> to vector<1x128xf32>
    %25 = arith.addf %22, %24 : vector<1x128xf32>
    %cst_22 = arith.constant 0.000000e+00 : f32
    %26 = vector.broadcast %cst_22 : f32 to vector<1x128xf32>
    %27 = arith.subf %26, %25 : vector<1x128xf32>
    %28 = math.exp %27 : vector<1x128xf32>
    %cst_23 = arith.constant 1.000000e+00 : f32
    %29 = vector.broadcast %cst_23 : f32 to vector<1x128xf32>
    %30 = arith.addf %29, %28 : vector<1x128xf32>
    %31 = tpu.reciprocal %30 : vector<1x128xf32> -> vector<1x128xf32>
    %c0_24 = arith.constant 0 : index
    %c0_25 = arith.constant 0 : index
    %32 = vector.load %arg10[%c0_24, %c0_25] : memref<1x128xf32, #tpu.memory_space<vmem>>, vector<1x128xf32>
    tpu.vector_store %arg10[%c0_24, %c0_25], %31 {strides = array<i32>} : memref<1x128xf32, #tpu.memory_space<vmem>>, vector<1x128xf32>,
    return
  }
  func.func @transform_0(%arg0: i32) -> (i32, i32) {
    %c0_i32 = arith.constant 0 : i32
    %c0_i32_0 = arith.constant 0 : i32
    return %c0_i32, %arg0 : i32, i32
  }
  func.func @transform_1(%arg0: i32) -> (i32, i32) {
    %c0_i32 = arith.constant 0 : i32
    %c0_i32_0 = arith.constant 0 : i32
    return %c0_i32, %arg0 : i32, i32
  }
  func.func @transform_2(%arg0: i32) -> (i32, i32) {
    %c0_i32 = arith.constant 0 : i32
    %c0_i32_0 = arith.constant 0 : i32
    %c0_i32_1 = arith.constant 0 : i32
    return %c0_i32, %c0_i32_0 : i32, i32
  }
  func.func @transform_3(%arg0: i32) -> (i32, i32) {
    %c0_i32 = arith.constant 0 : i32
    %c0_i32_0 = arith.constant 0 : i32
    %c0_i32_1 = arith.constant 0 : i32
    return %c0_i32, %c0_i32_0 : i32, i32
  }
  func.func @transform_4(%arg0: i32) -> (i32, i32) {
    %c0_i32 = arith.constant 0 : i32
    %c0_i32_0 = arith.constant 0 : i32
    %c0_i32_1 = arith.constant 0 : i32
    return %c0_i32, %c0_i32_0 : i32, i32
  }
  func.func @transform_5(%arg0: i32) -> (i32, i32) {
    %c0_i32 = arith.constant 0 : i32
    %c0_i32_0 = arith.constant 0 : i32
    %c0_i32_1 = arith.constant 0 : i32
    return %c0_i32, %c0_i32_0 : i32, i32
  }
  func.func @transform_6(%arg0: i32) -> (i32, i32) {
    %c0_i32 = arith.constant 0 : i32
    %c0_i32_0 = arith.constant 0 : i32
    %c0_i32_1 = arith.constant 0 : i32
    return %c0_i32, %c0_i32_0 : i32, i32
  }
  func.func @transform_7(%arg0: i32) -> (i32, i32) {
    %c0_i32 = arith.constant 0 : i32
    %c0_i32_0 = arith.constant 0 : i32
    %c0_i32_1 = arith.constant 0 : i32
    return %c0_i32, %c0_i32_0 : i32, i32
  }
  func.func @transform_8(%arg0: i32) -> (i32, i32) {
    %c0_i32 = arith.constant 0 : i32
    %c0_i32_0 = arith.constant 0 : i32
    %c0_i32_1 = arith.constant 0 : i32
    return %c0_i32, %c0_i32_0 : i32, i32
  }
  func.func @transform_9(%arg0: i32) -> (i32, i32) {
    %c0_i32 = arith.constant 0 : i32
    %c0_i32_0 = arith.constant 0 : i32
    return %c0_i32, %arg0 : i32, i32
  }
}

</mosaic_0001>

<llo_original>
// kernel: tpu_custom_call.1
$region0: #{tpu_custom_call.1}
  #allocation0 [shape = 'u32[]', space=smem, size = 0x4, offset = 0x4, fixed_abs, tag = 'smem constant byte address 0x4 - core index']
  #allocation1 [shape = 'u32[144,128]{1,0:T(1,128)}', space=vmem, size = 0x12000, scoped, tag = 'internal scratch']
  #allocation2 [shape = 'f32[1,1]{1,0:T(1,128)S(1)}', space=vmem, size = 0x200, scoped, tag = 'scoped memory for tpu_custom_call.1']
  %s0 = inlined_call_operand.vmem [shape: bf16[20,8], index: 0, kind: input, shape index: {}]
  %s1 = inlined_call_operand.vmem [shape: bf16[20,8], index: 1, kind: input, shape index: {}]
  %s2 = inlined_call_operand.vmem [shape: f32[20,20], index: 2, kind: input, shape index: {}]
  %s3 = inlined_call_operand.vmem [shape: f32[20,20], index: 3, kind: input, shape index: {}]
  %s4 = inlined_call_operand.vmem [shape: f32[20,1], index: 4, kind: input, shape index: {}]
  %s5 = inlined_call_operand.vmem [shape: f32[10,20], index: 5, kind: input, shape index: {}]
  %s6 = inlined_call_operand.vmem [shape: f32[10,1], index: 6, kind: input, shape index: {}]
  %s7 = inlined_call_operand.vmem [shape: f32[1,10], index: 7, kind: input, shape index: {}]
  %s8 = inlined_call_operand.<no memory space> [shape: f32[1,1], index: 8, kind: input, shape index: {}]
  %s9 = inlined_call_operand.hbm [shape: f32[1,8], index: 9, kind: output, shape index: {}]
  %s10 = sld [smem:[#allocation0]]
  $region46: #{tpu_custom_call.1} parent=0
    _
  %s12 = ssub.s32 1, %s10
  %s13 = scalar_select 0, %s12, %s10
  %v14 = vstv %s8
  %15 = vst [vmem:[#allocation2] sm:$0x1] %v14
  $region1: #{tpu_custom_call.1} parent=0
    #allocation3 [shape = 'u8[512]{0}', space=vmem, size = 0x400, scoped, tag = 'output window, operand 0, single buffered']
    #allocation4 [shape = 's32[1]{0}', space=sflag, size = 0x4, scoped, tag = 'scoped memory for tpu_custom_call.1']
    %16 = vsyncpa [#allocation4], 0
    // Predicated region
    $region2: #{tpu_custom_call.1} parent=1 // pred_check
      _
    $region3: #{tpu_custom_call.1} parent=1 // pred_check_branch
      %18 = sbr.rel (0) target = $region5
    $region4: #{tpu_custom_call.1} parent=1 // pred_region
      _
    $region5: #{tpu_custom_call.1} parent=1 // pred_fallthru
      _
    // Predicated region
    $region6: #{tpu_custom_call.1} parent=1 // pred_check
      _
    $region7: #{tpu_custom_call.1} parent=1 // pred_check_branch
      %20 = sbr.rel (0) target = $region9
    $region8: #{tpu_custom_call.1} parent=1 // pred_region
      _
    $region9: #{tpu_custom_call.1} parent=1 // pred_fallthru
      _
    // Predicated region
    $region10: #{tpu_custom_call.1} parent=1 // pred_check
      _
    $region11: #{tpu_custom_call.1} parent=1 // pred_check_branch
      %22 = sbr.rel (0) target = $region13
    $region12: #{tpu_custom_call.1} parent=1 // pred_region
      _
    $region13: #{tpu_custom_call.1} parent=1 // pred_fallthru
      _
    // Predicated region
    $region14: #{tpu_custom_call.1} parent=1 // pred_check
      _
    $region15: #{tpu_custom_call.1} parent=1 // pred_check_branch
      %24 = sbr.rel (0) target = $region17
    $region16: #{tpu_custom_call.1} parent=1 // pred_region
      _
    $region17: #{tpu_custom_call.1} parent=1 // pred_fallthru
      _
    // Predicated region
    $region18: #{tpu_custom_call.1} parent=1 // pred_check
      _
    $region19: #{tpu_custom_call.1} parent=1 // pred_check_branch
      %26 = sbr.rel (0) target = $region21
    $region20: #{tpu_custom_call.1} parent=1 // pred_region
      _
    $region21: #{tpu_custom_call.1} parent=1 // pred_fallthru
      _
    // Predicated region
    $region22: #{tpu_custom_call.1} parent=1 // pred_check
      _
    $region23: #{tpu_custom_call.1} parent=1 // pred_check_branch
      %28 = sbr.rel (0) target = $region25
    $region24: #{tpu_custom_call.1} parent=1 // pred_region
      _
    $region25: #{tpu_custom_call.1} parent=1 // pred_fallthru
      _
    // Predicated region
    $region26: #{tpu_custom_call.1} parent=1 // pred_check
      _
    $region27: #{tpu_custom_call.1} parent=1 // pred_check_branch
      %30 = sbr.rel (0) target = $region29
    $region28: #{tpu_custom_call.1} parent=1 // pred_region
      _
    $region29: #{tpu_custom_call.1} parent=1 // pred_fallthru
      _
    // Predicated region
    $region30: #{tpu_custom_call.1} parent=1 // pred_check
      _
    $region31: #{tpu_custom_call.1} parent=1 // pred_check_branch
      %32 = sbr.rel (0) target = $region33
    $region32: #{tpu_custom_call.1} parent=1 // pred_region
      _
    $region33: #{tpu_custom_call.1} parent=1 // pred_fallthru
      _
    // Predicated region
    $region34: #{tpu_custom_call.1} parent=1 // pred_check
      _
    $region35: #{tpu_custom_call.1} parent=1 // pred_check_branch
      %34 = sbr.rel (0) target = $region37
    $region36: #{tpu_custom_call.1} parent=1 // pred_region
      _
    $region37: #{tpu_custom_call.1} parent=1 // pred_fallthru
      _
    %v35 = vld [vmem:[%s0] sm:$0xf]
    %v36 = vld [vmem:[%s0 + $0x4] sm:$0xf]
    %v37 = vld [vmem:[%s0 + $0x8] sm:$0x3]
    %v38 = vunpack.c.l.bf16 %v35
    %v39 = vunpack.c.l.bf16 %v36
    %v40 = vunpack.c.l.bf16 %v37
    %v41 = vld [vmem:[%s1] sm:$0xf]
    %v42 = vld [vmem:[%s1 + $0x4] sm:$0xf]
    %v43 = vld [vmem:[%s1 + $0x8] sm:$0x3]
    %v44 = vunpack.c.l.bf16 %v41
    %v45 = vunpack.c.l.bf16 %v42
    %v46 = vunpack.c.l.bf16 %v43
    %v47 = vld [vmem:[%s2] sm:$0xff]
    %v48 = vld [vmem:[%s2 + $0x8] sm:$0xff]
    %v49 = vld [vmem:[%s2 + $0x10] sm:$0xf]
    %v50 = vld [vmem:[%s3] sm:$0xff]
    %v51 = vld [vmem:[%s3 + $0x8] sm:$0xff]
    %v52 = vld [vmem:[%s3 + $0x10] sm:$0xf]
    %vm53 = vcmask 162816
    %v55 = vsel %vm53, %v50, 0
    %v58 = vsel %vm53, %v51, 0
    %v61 = vsel %vm53, %v52, 0
    %vm63 = vcmask 1043456
    %v65 = vsel %vm63, %v46, 0
    %67 = vmatprep.subr.mxu0 0.0
    %68 = vmatpush1.msra.mxu0 %v44
    %69 = vmatprep.subr.mxu0 0.0
    %70 = vmatpush1.msra.mxu0 %v45
    %71 = vmatprep.subr.mxu0 0.0
    %72 = vmatpush1.msra.mxu0 %v65
    %73 = vmatprep.subr.mxu0 0.0
    %74 = vmatpush1.msra.mxu0 0.0
    %75 = vmatprep.subr.mxu0 0.0
    %76 = vmatpush1.msra.mxu0 0.0
    %77 = vmatprep.subr.mxu0 0.0
    %78 = vmatpush1.msra.mxu0 0.0
    %79 = vmatprep.subr.mxu0 0.0
    %80 = vmatpush1.msra.mxu0 0.0
    %81 = vmatprep.subr.mxu0 0.0
    %82 = vmatpush1.msra.mxu0 0.0
    %83 = vmatprep.subr.mxu0 0.0
    %84 = vmatpush1.msra.mxu0 0.0
    %85 = vmatprep.subr.mxu0 0.0
    %86 = vmatpush1.msra.mxu0 0.0
    %87 = vmatprep.subr.mxu0 0.0
    %88 = vmatpush1.msra.mxu0 0.0
    %89 = vmatprep.subr.mxu0 0.0
    %90 = vmatpush1.msra.mxu0 0.0
    %91 = vmatprep.subr.mxu0 0.0
    %92 = vmatpush1.msra.mxu0 0.0
    %93 = vmatprep.subr.mxu0 0.0
    %94 = vmatpush1.msra.mxu0 0.0
    %95 = vmatprep.subr.mxu0 0.0
    %96 = vmatpush1.msra.mxu0 0.0
    %97 = vmatprep.subr.mxu0 0.0
    %98 = vmatpush1.msra.mxu0 0.0
    %99 = vmatprep.subr.mxu0 0.0
    %100 = vmatpush1.msra.mxu0 0.0
    %101 = vmatprep.subr.mxu0 0.0
    %102 = vmatpush1.msra.mxu0 0.0
    %103 = vmatprep.subr.mxu0 0.0
    %104 = vmatpush1.msra.mxu0 0.0
    %105 = vmatprep.subr.mxu0 0.0
    %106 = vmatpush1.msra.mxu0 0.0
    %107 = vmatprep.subr.mxu0 0.0
    %108 = vmatpush1.msra.mxu0 0.0
    %109 = vmatprep.subr.mxu0 0.0
    %110 = vmatpush1.msra.mxu0 0.0
    %111 = vmatprep.subr.mxu0 0.0
    %112 = vmatpush1.msra.mxu0 0.0
    %113 = vmatprep.subr.mxu0 0.0
    %114 = vmatpush1.msra.mxu0 0.0
    %115 = vmatprep.subr.mxu0 0.0
    %116 = vmatpush1.msra.mxu0 0.0
    %117 = vmatprep.subr.mxu0 0.0
    %118 = vmatpush1.msra.mxu0 0.0
    %119 = vmatprep.subr.mxu0 0.0
    %120 = vmatpush1.msra.mxu0 0.0
    %121 = vmatprep.subr.mxu0 0.0
    %122 = vmatpush1.msra.mxu0 0.0
    %123 = vmatprep.subr.mxu0 0.0
    %124 = vmatpush1.msra.mxu0 0.0
    %125 = vmatprep.subr.mxu0 0.0
    %126 = vmatpush1.msra.mxu0 0.0
    %127 = vmatprep.subr.mxu0 0.0
    %128 = vmatpush1.msra.mxu0 0.0
    %129 = vmatprep.subr.mxu0 0.0
    %130 = vmatpush1.msra.mxu0 0.0
    %131 = vmatprep.mubr.f32.mxu0 0.0
    %132 = vmatmul.mubr.f32.gmra.mrb[0].mxu0 %v55
    %v133 = vpop.f32.mrb[0].mxu0
    %v134 = vadd.f32 0.0, %v133
    %v135 = vpop.f32.mrb[0].mxu0
    %136 = vmatprep.mubr.f32.mxu0 0.0
    %137 = vmatmul.mubr.f32.gmra.mrb[0].mxu0 %v58
    %v138 = vpop.f32.mrb[0].mxu0
    %v139 = vadd.f32 0.0, %v138
    %v140 = vpop.f32.mrb[0].mxu0
    %141 = vmatprep.mubr.f32.mxu0 0.0
    %142 = vmatmul.mubr.f32.gmra.mrb[0].mxu0 %v61
    %v143 = vpop.f32.mrb[0].mxu0
    %v144 = vadd.f32 0.0, %v143
    %v145 = vpop.f32.mrb[0].mxu0
    %146 = vdwg.mxu0
    %v148 = vsel %vm53, %v47, 0
    %v151 = vsel %vm53, %v48, 0
    %v154 = vsel %vm53, %v49, 0
    %v157 = vsel %vm63, %v40, 0
    %159 = vmatprep.subr.mxu0 0.0
    %160 = vmatpush1.msra.mxu0 %v38
    %161 = vmatprep.subr.mxu0 0.0
    %162 = vmatpush1.msra.mxu0 %v39
    %163 = vmatprep.subr.mxu0 0.0
    %164 = vmatpush1.msra.mxu0 %v157
    %165 = vmatprep.subr.mxu0 0.0
    %166 = vmatpush1.msra.mxu0 0.0
    %167 = vmatprep.subr.mxu0 0.0
    %168 = vmatpush1.msra.mxu0 0.0
    %169 = vmatprep.subr.mxu0 0.0
    %170 = vmatpush1.msra.mxu0 0.0
    %171 = vmatprep.subr.mxu0 0.0
    %172 = vmatpush1.msra.mxu0 0.0
    %173 = vmatprep.subr.mxu0 0.0
    %174 = vmatpush1.msra.mxu0 0.0
    %175 = vmatprep.subr.mxu0 0.0
    %176 = vmatpush1.msra.mxu0 0.0
    %177 = vmatprep.subr.mxu0 0.0
    %178 = vmatpush1.msra.mxu0 0.0
    %179 = vmatprep.subr.mxu0 0.0
    %180 = vmatpush1.msra.mxu0 0.0
    %181 = vmatprep.subr.mxu0 0.0
    %182 = vmatpush1.msra.mxu0 0.0
    %183 = vmatprep.subr.mxu0 0.0
    %184 = vmatpush1.msra.mxu0 0.0
    %185 = vmatprep.subr.mxu0 0.0
    %186 = vmatpush1.msra.mxu0 0.0
    %187 = vmatprep.subr.mxu0 0.0
    %188 = vmatpush1.msra.mxu0 0.0
    %189 = vmatprep.subr.mxu0 0.0
    %190 = vmatpush1.msra.mxu0 0.0
    %191 = vmatprep.subr.mxu0 0.0
    %192 = vmatpush1.msra.mxu0 0.0
    %193 = vmatprep.subr.mxu0 0.0
    %194 = vmatpush1.msra.mxu0 0.0
    %195 = vmatprep.subr.mxu0 0.0
    %196 = vmatpush1.msra.mxu0 0.0
    %197 = vmatprep.subr.mxu0 0.0
    %198 = vmatpush1.msra.mxu0 0.0
    %199 = vmatprep.subr.mxu0 0.0
    %200 = vmatpush1.msra.mxu0 0.0
    %201 = vmatprep.subr.mxu0 0.0
    %202 = vmatpush1.msra.mxu0 0.0
    %203 = vmatprep.subr.mxu0 0.0
    %204 = vmatpush1.msra.mxu0 0.0
    %205 = vmatprep.subr.mxu0 0.0
    %206 = vmatpush1.msra.mxu0 0.0
    %207 = vmatprep.subr.mxu0 0.0
    %208 = vmatpush1.msra.mxu0 0.0
    %209 = vmatprep.subr.mxu0 0.0
    %210 = vmatpush1.msra.mxu0 0.0
    %211 = vmatprep.subr.mxu0 0.0
    %212 = vmatpush1.msra.mxu0 0.0
    %213 = vmatprep.subr.mxu0 0.0
    %214 = vmatpush1.msra.mxu0 0.0
    %215 = vmatprep.subr.mxu0 0.0
    %216 = vmatpush1.msra.mxu0 0.0
    %217 = vmatprep.subr.mxu0 0.0
    %218 = vmatpush1.msra.mxu0 0.0
    %219 = vmatprep.subr.mxu0 0.0
    %220 = vmatpush1.msra.mxu0 0.0
    %221 = vmatprep.subr.mxu0 0.0
    %222 = vmatpush1.msra.mxu0 0.0
    %223 = vmatprep.mubr.f32.mxu0 0.0
    %224 = vmatmul.mubr.f32.gmra.mrb[0].mxu0 %v148
    %v225 = vpop.f32.mrb[0].mxu0
    %v226 = vadd.f32 %v134, %v225
    %v227 = vpop.f32.mrb[0].mxu0
    %228 = vmatprep.mubr.f32.mxu0 0.0
    %229 = vmatmul.mubr.f32.gmra.mrb[0].mxu0 %v151
    %v230 = vpop.f32.mrb[0].mxu0
    %v231 = vadd.f32 %v139, %v230
    %v232 = vpop.f32.mrb[0].mxu0
    %233 = vmatprep.mubr.f32.mxu0 0.0
    %234 = vmatmul.mubr.f32.gmra.mrb[0].mxu0 %v154
    %v235 = vpop.f32.mrb[0].mxu0
    %v236 = vadd.f32 %v144, %v235
    %v237 = vpop.f32.mrb[0].mxu0
    %238 = vdwg.mxu0
    %v239 = vld [vmem:[%s4] sm:$0xff]
    %v240 = vld [vmem:[%s4 + $0x8] sm:$0xff]
    %v241 = vld [vmem:[%s4 + $0x10] sm:$0xf]
    %243 = vset.pattern.permute.xlu0 0
    %244 = vperm.xlu0 %243, %v239
    %v245 = vpop.permute.xlu0 %244
    %248 = vset.pattern.permute.xlu0 0
    %249 = vperm.xlu0 %248, %v240
    %v250 = vpop.permute.xlu0 %249
    %253 = vset.pattern.permute.xlu0 0
    %254 = vperm.xlu0 %253, %v241
    %v255 = vpop.permute.xlu0 %254
    %v257 = vadd.f32 %v226, %v245
    %v258 = vadd.f32 %v231, %v250
    %v259 = vadd.f32 %v236, %v255
    %v260 = vmax.f32 %v257, 0.0
    %v261 = vmax.f32 %v258, 0.0
    %v262 = vmax.f32 %v259, 0.0
    %v263 = vld [vmem:[%s5] sm:$0xff]
    %v264 = vld [vmem:[%s5 + $0x8] sm:$0x3]
    %v265 = vld [vmem:[%s6] sm:$0xff]
    %v266 = vld [vmem:[%s6 + $0x8] sm:$0x3]
    %268 = vset.pattern.permute.xlu0 0
    %269 = vperm.xlu0 %268, %v265
    %v270 = vpop.permute.xlu0 %269
    %273 = vset.pattern.permute.xlu0 0
    %274 = vperm.xlu0 %273, %v266
    %v275 = vpop.permute.xlu0 %274
    %v278 = vsel %vm53, %v263, 0
    %v281 = vsel %vm53, %v264, 0
    %v284 = vsel %vm63, %v262, 0
    %286 = vmatprep.subr.mxu0 0.0
    %287 = vmatpush1.msra.mxu0 %v260
    %288 = vmatprep.subr.mxu0 0.0
    %289 = vmatpush1.msra.mxu0 %v261
    %290 = vmatprep.subr.mxu0 0.0
    %291 = vmatpush1.msra.mxu0 %v284
    %292 = vmatprep.subr.mxu0 0.0
    %293 = vmatpush1.msra.mxu0 0.0
    %294 = vmatprep.subr.mxu0 0.0
    %295 = vmatpush1.msra.mxu0 0.0
    %296 = vmatprep.subr.mxu0 0.0
    %297 = vmatpush1.msra.mxu0 0.0
    %298 = vmatprep.subr.mxu0 0.0
    %299 = vmatpush1.msra.mxu0 0.0
    %300 = vmatprep.subr.mxu0 0.0
    %301 = vmatpush1.msra.mxu0 0.0
    %302 = vmatprep.subr.mxu0 0.0
    %303 = vmatpush1.msra.mxu0 0.0
    %304 = vmatprep.subr.mxu0 0.0
    %305 = vmatpush1.msra.mxu0 0.0
    %306 = vmatprep.subr.mxu0 0.0
    %307 = vmatpush1.msra.mxu0 0.0
    %308 = vmatprep.subr.mxu0 0.0
    %309 = vmatpush1.msra.mxu0 0.0
    %310 = vmatprep.subr.mxu0 0.0
    %311 = vmatpush1.msra.mxu0 0.0
    %312 = vmatprep.subr.mxu0 0.0
    %313 = vmatpush1.msra.mxu0 0.0
    %314 = vmatprep.subr.mxu0 0.0
    %315 = vmatpush1.msra.mxu0 0.0
    %316 = vmatprep.subr.mxu0 0.0
    %317 = vmatpush1.msra.mxu0 0.0
    %318 = vmatprep.subr.mxu0 0.0
    %319 = vmatpush1.msra.mxu0 0.0
    %320 = vmatprep.subr.mxu0 0.0
    %321 = vmatpush1.msra.mxu0 0.0
    %322 = vmatprep.subr.mxu0 0.0
    %323 = vmatpush1.msra.mxu0 0.0
    %324 = vmatprep.subr.mxu0 0.0
    %325 = vmatpush1.msra.mxu0 0.0
    %326 = vmatprep.subr.mxu0 0.0
    %327 = vmatpush1.msra.mxu0 0.0
    %328 = vmatprep.subr.mxu0 0.0
    %329 = vmatpush1.msra.mxu0 0.0
    %330 = vmatprep.subr.mxu0 0.0
    %331 = vmatpush1.msra.mxu0 0.0
    %332 = vmatprep.subr.mxu0 0.0
    %333 = vmatpush1.msra.mxu0 0.0
    %334 = vmatprep.subr.mxu0 0.0
    %335 = vmatpush1.msra.mxu0 0.0
    %336 = vmatprep.subr.mxu0 0.0
    %337 = vmatpush1.msra.mxu0 0.0
    %338 = vmatprep.subr.mxu0 0.0
    %339 = vmatpush1.msra.mxu0 0.0
    %340 = vmatprep.subr.mxu0 0.0
    %341 = vmatpush1.msra.mxu0 0.0
    %342 = vmatprep.subr.mxu0 0.0
    %343 = vmatpush1.msra.mxu0 0.0
    %344 = vmatprep.subr.mxu0 0.0
    %345 = vmatpush1.msra.mxu0 0.0
    %346 = vmatprep.subr.mxu0 0.0
    %347 = vmatpush1.msra.mxu0 0.0
    %348 = vmatprep.subr.mxu0 0.0
    %349 = vmatpush1.msra.mxu0 0.0
    %350 = vmatprep.mubr.f32.mxu0 0.0
    %351 = vmatmul.mubr.f32.gmra.mrb[0].mxu0 %v278
    %v352 = vpop.f32.mrb[0].mxu0
    %v353 = vadd.f32 %v270, %v352
    %v354 = vpop.f32.mrb[0].mxu0
    %355 = vmatprep.mubr.f32.mxu0 0.0
    %356 = vmatmul.mubr.f32.gmra.mrb[0].mxu0 %v281
    %v357 = vpop.f32.mrb[0].mxu0
    %v358 = vadd.f32 %v275, %v357
    %v359 = vpop.f32.mrb[0].mxu0
    %360 = vdwg.mxu0
    %v361 = vmax.f32 %v353, 0.0
    %v362 = vmax.f32 %v358, 0.0
    %v363 = vld [vmem:[%s7] sm:$0x1]
    %v364 = vld [vmem:[#allocation2] sm:$0x1]
    %366 = vset.pattern.permute.xlu0 0
    %367 = vperm.xlu0 %366, %v364
    %v368 = vpop.permute.xlu0 %367
    %v370 = vlaneseq
    %v371 = vshrl.u32 %v370, 7
    %v372 = vsub.s32 0, %v371
    %v373 = vrot.slane %v368, %v372
    %vm374 = vcmask 80896
    %v376 = vsel %vm374, %v363, 0
    %vm378 = vcmask 1041408
    %v380 = vsel %vm378, %v362, 0
    %382 = vmatprep.subr.mxu0 0.0
    %383 = vmatpush1.msra.mxu0 %v361
    %384 = vmatprep.subr.mxu0 0.0
    %385 = vmatpush1.msra.mxu0 %v380
    %386 = vmatprep.subr.mxu0 0.0
    %387 = vmatpush1.msra.mxu0 0.0
    %388 = vmatprep.subr.mxu0 0.0
    %389 = vmatpush1.msra.mxu0 0.0
    %390 = vmatprep.subr.mxu0 0.0
    %391 = vmatpush1.msra.mxu0 0.0
    %392 = vmatprep.subr.mxu0 0.0
    %393 = vmatpush1.msra.mxu0 0.0
    %394 = vmatprep.subr.mxu0 0.0
    %395 = vmatpush1.msra.mxu0 0.0
    %396 = vmatprep.subr.mxu0 0.0
    %397 = vmatpush1.msra.mxu0 0.0
    %398 = vmatprep.subr.mxu0 0.0
    %399 = vmatpush1.msra.mxu0 0.0
    %400 = vmatprep.subr.mxu0 0.0
    %401 = vmatpush1.msra.mxu0 0.0
    %402 = vmatprep.subr.mxu0 0.0
    %403 = vmatpush1.msra.mxu0 0.0
    %404 = vmatprep.subr.mxu0 0.0
    %405 = vmatpush1.msra.mxu0 0.0
    %406 = vmatprep.subr.mxu0 0.0
    %407 = vmatpush1.msra.mxu0 0.0
    %408 = vmatprep.subr.mxu0 0.0
    %409 = vmatpush1.msra.mxu0 0.0
    %410 = vmatprep.subr.mxu0 0.0
    %411 = vmatpush1.msra.mxu0 0.0
    %412 = vmatprep.subr.mxu0 0.0
    %413 = vmatpush1.msra.mxu0 0.0
    %414 = vmatprep.subr.mxu0 0.0
    %415 = vmatpush1.msra.mxu0 0.0
    %416 = vmatprep.subr.mxu0 0.0
    %417 = vmatpush1.msra.mxu0 0.0
    %418 = vmatprep.subr.mxu0 0.0
    %419 = vmatpush1.msra.mxu0 0.0
    %420 = vmatprep.subr.mxu0 0.0
    %421 = vmatpush1.msra.mxu0 0.0
    %422 = vmatprep.subr.mxu0 0.0
    %423 = vmatpush1.msra.mxu0 0.0
    %424 = vmatprep.subr.mxu0 0.0
    %425 = vmatpush1.msra.mxu0 0.0
    %426 = vmatprep.subr.mxu0 0.0
    %427 = vmatpush1.msra.mxu0 0.0
    %428 = vmatprep.subr.mxu0 0.0
    %429 = vmatpush1.msra.mxu0 0.0
    %430 = vmatprep.subr.mxu0 0.0
    %431 = vmatpush1.msra.mxu0 0.0
    %432 = vmatprep.subr.mxu0 0.0
    %433 = vmatpush1.msra.mxu0 0.0
    %434 = vmatprep.subr.mxu0 0.0
    %435 = vmatpush1.msra.mxu0 0.0
    %436 = vmatprep.subr.mxu0 0.0
    %437 = vmatpush1.msra.mxu0 0.0
    %438 = vmatprep.subr.mxu0 0.0
    %439 = vmatpush1.msra.mxu0 0.0
    %440 = vmatprep.subr.mxu0 0.0
    %441 = vmatpush1.msra.mxu0 0.0
    %442 = vmatprep.subr.mxu0 0.0
    %443 = vmatpush1.msra.mxu0 0.0
    %444 = vmatprep.subr.mxu0 0.0
    %445 = vmatpush1.msra.mxu0 0.0
    %446 = vmatprep.mubr.f32.mxu0 0.0
    %447 = vmatmul.mubr.f32.gmra.mrb[0].mxu0 %v376
    %v448 = vpop.f32.mrb[0].mxu0
    %v449 = vadd.f32 %v373, %v448
    %v450 = vpop.f32.mrb[0].mxu0
    %451 = vdwg.mxu0
    %v452 = vsub.f32 0.0, %v449
    %v453 = vmul.f32 %v452, 1.442695
    %v454 = vpow.pop %v453
    %v455 = vadd.f32 %v454, 1.0
    %v456 = vrcp.pop %v455
    %457 = vst [vmem:[#allocation3] sm:$0x1] %v456
    // Predicated region
    $region38: #{tpu_custom_call.1} parent=1 // pred_check
      _
    $region39: #{tpu_custom_call.1} parent=1 // pred_check_branch
      %459 = sbr.rel (0) target = $region41
    $region40: #{tpu_custom_call.1} parent=1 // pred_region
      %s461 = ssub.s32 16, 16
      %462 = vsyncadd [#allocation4], %s461
      %s464 = sshll.u32 [#allocation3], 4
      %s465 = int_to_ptr.vmem [resolvable:$true] %s464
      %467 = dma.vmem_to_hbm [thread:$0]  %s465, 16, %s9, [#allocation4]
    $region41: #{tpu_custom_call.1} parent=1 // pred_fallthru
      _
    // Predicated region
    $region42: #{tpu_custom_call.1} parent=1 // pred_check
      _
    $region43: #{tpu_custom_call.1} parent=1 // pred_check_branch
      %469 = sbr.rel (0) target = $region45
    $region44: #{tpu_custom_call.1} parent=1 // pred_region
      %470 = dma.done [#allocation4], 16
    $region45: #{tpu_custom_call.1} parent=1 // pred_fallthru
      _
    %471 = vsyncpa [#allocation4], 1

</llo_original>
